<compile_context>
chip_gen: v6e
topology: v6e:2x2x1
jax: 0.10.0
libtpu: 0.0.40
codegen_flags: <defaults>
</compile_context>

<pallas_src>
import functools

import jax
import jax.numpy as jnp
from jax import lax
from jax.experimental import pallas as pl
from jax.experimental.pallas import tpu as pltpu


def _scores_kernel(tile, uidx_ref, iidx_ref, eu_hbm, ei_hbm, scores_ref,
                   u_buf, i_buf, sem):
    """One candidate tile: DMA-gather user/item rows from HBM, dot over emb_dim.

    Args (after the closed-over static `tile`):
      uidx_ref, iidx_ref : SMEM scalar-prefetch index arrays, shape (N_pad,) int32
      eu_hbm, ei_hbm     : raw HBM refs of the embedding tables [rows, D]
      scores_ref         : lane-dense output tile (1, tile) float32
      u_buf, i_buf       : VMEM scratch (tile, D)
      sem                : 2 shared DMA semaphores (one per table)
    """
    base = pl.program_id(0) * tile

    # Issue all 2*tile row-gather DMAs for this tile (indices read from SMEM).
    def _issue(c, carry):
        u = uidx_ref[base + c]
        i = iidx_ref[base + c]
        pltpu.make_async_copy(eu_hbm.at[pl.ds(u, 1), :],
                              u_buf.at[pl.ds(c, 1), :], sem.at[0]).start()
        pltpu.make_async_copy(ei_hbm.at[pl.ds(i, 1), :],
                              i_buf.at[pl.ds(c, 1), :], sem.at[1]).start()
        return carry

    lax.fori_loop(0, tile, _issue, 0)

    # Wait for all of them. Each wait retires one row-sized copy on the shared
    # semaphore (the source index of the wait descriptor is irrelevant; only the
    # semaphore and the copy size matter).
    def _wait(c, carry):
        pltpu.make_async_copy(eu_hbm.at[pl.ds(0, 1), :],
                              u_buf.at[pl.ds(c, 1), :], sem.at[0]).wait()
        pltpu.make_async_copy(ei_hbm.at[pl.ds(0, 1), :],
                              i_buf.at[pl.ds(c, 1), :], sem.at[1]).wait()
        return carry

    lax.fori_loop(0, tile, _wait, 0)

    # scores[c] = sum_d u_emb[c, d] * i_emb[c, d]  -> stored lane-dense (1, tile).
    prod = u_buf[...].astype(jnp.float32) * i_buf[...].astype(jnp.float32)
    scores_ref[...] = jnp.sum(prod, axis=1)[None, :]


def _softmax_kernel(n_valid, inv_temp, scores_ref, probs_ref):
    """Lane-dense softmax over the candidate axis with padded-lane masking."""
    s = scores_ref[...] * inv_temp
    lane = lax.broadcasted_iota(jnp.int32, s.shape, 1)
    s = jnp.where(lane < n_valid, s, -1e30)          # padded lanes -> prob 0
    m = jnp.max(s, axis=1, keepdims=True)
    e = jnp.exp(s - m)
    denom = jnp.sum(e, axis=1, keepdims=True)
    probs_ref[...] = e * pl.reciprocal(denom, approx=True)


def adv_sampler_scores_probs(u_idx, i_idx, emb_users, emb_items,
                             *, tile=128, temperature=1.0):
    """Returns (scores[N], probs[N]) computed by the Pallas kernels."""
    n = u_idx.shape[0]
    d = emb_users.shape[1]
    n_tiles = (n + tile - 1) // tile
    n_pad = n_tiles * tile

    # Clamp (PyTorch's Embedding would raise on out-of-range; the DMA gather must
    # stay in-bounds) and pad the index arrays to the tile boundary with row 0.
    u_pad = jnp.zeros((n_pad,), jnp.int32).at[:n].set(
        jnp.clip(u_idx.astype(jnp.int32), 0, emb_users.shape[0] - 1))
    i_pad = jnp.zeros((n_pad,), jnp.int32).at[:n].set(
        jnp.clip(i_idx.astype(jnp.int32), 0, emb_items.shape[0] - 1))

    itemsize = jnp.dtype(emb_users.dtype).itemsize
    scores_row = pl.pallas_call(
        functools.partial(_scores_kernel, tile),
        out_shape=jax.ShapeDtypeStruct((1, n_pad), jnp.float32),
        grid_spec=pltpu.PrefetchScalarGridSpec(
            num_scalar_prefetch=2,                       # u_pad, i_pad -> SMEM
            grid=(n_tiles,),
            in_specs=[pl.BlockSpec(memory_space=pl.ANY),  # emb_users stays in HBM
                      pl.BlockSpec(memory_space=pl.ANY)], # emb_items stays in HBM
            out_specs=pl.BlockSpec((1, tile), lambda t, uref, iref: (0, t)),
            scratch_shapes=[pltpu.VMEM((tile, d), emb_users.dtype),
                            pltpu.VMEM((tile, d), emb_items.dtype),
                            pltpu.SemaphoreType.DMA((2,))]),
        compiler_params=pltpu.CompilerParams(
            dimension_semantics=("parallel",),
            vmem_limit_bytes=32 * 1024 * 1024),
        cost_estimate=pl.CostEstimate(
            flops=2 * n_pad * d,
            transcendentals=0,
            bytes_accessed=2 * n_pad * d * itemsize + 2 * n_pad * 4 + n_pad * 4),
    )(u_pad, i_pad, emb_users, emb_items)

    # Annealed softmax. The reference module's torch.softmax(scores) has no
    # explicit temperature; temperature=1.0 reproduces it exactly.
    probs_row = pl.pallas_call(
        functools.partial(_softmax_kernel, n, 1.0 / float(temperature)),
        out_shape=jax.ShapeDtypeStruct((1, n_pad), jnp.float32),
        in_specs=[pl.BlockSpec(memory_space=pltpu.MemorySpace.VMEM)],
        out_specs=pl.BlockSpec(memory_space=pltpu.MemorySpace.VMEM),
        cost_estimate=pl.CostEstimate(
            flops=4 * n_pad, transcendentals=n_pad, bytes_accessed=2 * n_pad * 4),
    )(scores_row)

    return scores_row[0, :n], probs_row[0, :n]


@functools.partial(jax.jit, static_argnames=("k",))
def adv_sampler_forward(emb_users, emb_items, can_samples, sample_key, *, k):
    """Pure jitted forward: (gen_neg, can_samples[gen_neg], gen_neg_prob)."""
    u_idx = can_samples[:, 0]
    i_idx = can_samples[:, 1]
    scores, probs = adv_sampler_scores_probs(u_idx, i_idx, emb_users, emb_items)
    # torch.multinomial(probs, k, replacement=True) == categorical on logits=scores.
    gen_neg = jax.random.categorical(sample_key, scores, shape=(k,)).astype(jnp.int32)
    gen_neg_prob = probs[gen_neg]                    # torch.gather(probs, 0, gen_neg)
    gen_neg_samples = can_samples[gen_neg]
    return gen_neg, gen_neg_samples, gen_neg_prob


class AdvSamplerJAX:
    """JAX port of the PyTorch AdvSampler module (holds parameters only)."""

    def __init__(self, num_users, num_items, emb_dim, can_samples, key):
        self.num_users = num_users
        self.num_items = num_items
        self.emb_dim = emb_dim
        self.can_samples = can_samples.astype(jnp.int32)  # [N, 2]
        k_u, k_i = jax.random.split(key)
        # nn.init.uniform_(weight, -0.5, 0.5)
        self.emb_users = jax.random.uniform(
            k_u, (num_users, emb_dim), jnp.float32, minval=-0.5, maxval=0.5)
        self.emb_items = jax.random.uniform(
            k_i, (num_items, emb_dim), jnp.float32, minval=-0.5, maxval=0.5)

    def forward(self, k, sample_key):
        # jit is on the pure function; `self` is never traced (fixes prior TypeError).
        return adv_sampler_forward(self.emb_users, self.emb_items,
                                   self.can_samples, sample_key, k=int(k))


if __name__ == "__main__":
    key = jax.random.PRNGKey(0)
    k_emb, k_cu, k_ci, k_samp = jax.random.split(key, 4)

    num_users, num_items, emb_dim = 64, 96, 32
    n_candidates = 200      # not a multiple of 128 -> exercises padding + 2-tile grid
    k_neg = 8

    can_u = jax.random.randint(k_cu, (n_candidates, 1), 0, num_users, dtype=jnp.int32)
    can_i = jax.random.randint(k_ci, (n_candidates, 1), 0, num_items, dtype=jnp.int32)
    can_samples = jnp.concatenate([can_u, can_i], axis=1)   # [N, 2]

    sampler = AdvSamplerJAX(num_users, num_items, emb_dim, can_samples, k_emb)

    gen_neg, gen_neg_samples, gen_neg_prob = sampler.forward(k_neg, k_samp)
    jax.block_until_ready((gen_neg, gen_neg_samples, gen_neg_prob))

    assert gen_neg.shape == (k_neg,)
    assert gen_neg_samples.shape == (k_neg, 2)
    assert gen_neg_prob.shape == (k_neg,)
    assert bool(jnp.all((gen_neg >= 0) & (gen_neg < n_candidates)))

    # Cross-check the kernel's scores/probs against a pure-JAX reference.
    scores_k, probs_k = adv_sampler_scores_probs(
        can_samples[:, 0], can_samples[:, 1], sampler.emb_users, sampler.emb_items)
    jax.block_until_ready((scores_k, probs_k))
    sel_u = sampler.emb_users[can_samples[:, 0]]
    sel_i = sampler.emb_items[can_samples[:, 1]]
    scores_ref = jnp.sum(sel_u * sel_i, axis=1)
    probs_ref = jax.nn.softmax(scores_ref)
    assert jnp.allclose(scores_k, scores_ref, atol=1e-5, rtol=1e-5)
    assert jnp.allclose(probs_k, probs_ref, atol=1e-4, rtol=1e-3)

    print("KERNEL_OK")
</pallas_src>

<mosaic_0001>
module attributes {stable_mosaic.version = 11 : i64} {
  func.func @_softmax_kernel(%arg0: memref<1x256xf32, #tpu.memory_space<vmem>>, %arg1: memref<1x256xf32, #tpu.memory_space<vmem>>) attributes {dimension_semantics = [], scalar_prefetch = 0 : i64, scratch_operands = 0 : i64, tpu.core_type = #tpu.core_type<tc>} {
    %c0 = arith.constant 0 : index
    %c0_0 = arith.constant 0 : index
    %0 = vector.load %arg0[%c0, %c0_0] : memref<1x256xf32, #tpu.memory_space<vmem>>, vector<1x256xf32>
    %cst = arith.constant 1.000000e+00 : f32
    %1 = vector.broadcast %cst : f32 to vector<1x256xf32>
    %2 = arith.mulf %0, %1 : vector<1x256xf32>
    %3 = tpu.iota {dimensions = array<i32: 1>} : vector<1x256xi32>
    %c200_i32 = arith.constant 200 : i32
    %4 = vector.broadcast %c200_i32 : i32 to vector<1x256xi32>
    %5 = arith.cmpi slt, %3, %4 : vector<1x256xi32>
    %cst_1 = arith.constant -1.000000e+30 : f32
    %6 = vector.broadcast %cst_1 : f32 to vector<1x256xf32>
    %7 = arith.select %5, %2, %6 : vector<1x256xi1>, vector<1x256xf32>
    %cst_2 = arith.constant dense<0xFF800000> : vector<1xf32>
    %8 = vector.multi_reduction <maximumf>, %7, %cst_2 [1] : vector<1x256xf32> to vector<1xf32>
    %9 = vector.shape_cast %8 : vector<1xf32> to vector<1x1xf32>
    %10 = vector.broadcast %9 : vector<1x1xf32> to vector<1x256xf32>
    %11 = arith.subf %7, %10 : vector<1x256xf32>
    %12 = math.exp %11 : vector<1x256xf32>
    %cst_3 = arith.constant dense<0.000000e+00> : vector<1xf32>
    %13 = vector.multi_reduction <add>, %12, %cst_3 [1] : vector<1x256xf32> to vector<1xf32>
    %14 = vector.shape_cast %13 : vector<1xf32> to vector<1x1xf32>
    %15 = tpu.reciprocal %14 {approx = true} : vector<1x1xf32> -> vector<1x1xf32>
    %16 = vector.broadcast %15 : vector<1x1xf32> to vector<1x256xf32>
    %17 = arith.mulf %12, %16 : vector<1x256xf32>
    %c0_4 = arith.constant 0 : index
    %c0_5 = arith.constant 0 : index
    %18 = vector.load %arg1[%c0_4, %c0_5] : memref<1x256xf32, #tpu.memory_space<vmem>>, vector<1x256xf32>
    tpu.vector_store %arg1[%c0_4, %c0_5], %17 {strides = array<i32>} : memref<1x256xf32, #tpu.memory_space<vmem>>, vector<1x256xf32>,
    return
  }
}

module attributes {stable_mosaic.version = 11 : i64} {
  func.func @_scores_kernel(%arg0: i32, %arg1: memref<256xi32, #tpu.memory_space<smem>>, %arg2: memref<256xi32, #tpu.memory_space<smem>>, %arg3: memref<64x32xf32, #tpu.memory_space<any>>, %arg4: memref<96x32xf32, #tpu.memory_space<any>>, %arg5: memref<1x128xf32, #tpu.memory_space<vmem>>, %arg6: memref<128x32xf32, #tpu.memory_space<vmem>>, %arg7: memref<128x32xf32, #tpu.memory_space<vmem>>, %arg8: memref<2x!tpu.dma_semaphore, #tpu.memory_space<semaphore_mem>>) attributes {dimension_semantics = [#tpu.dimension_semantics<parallel>], iteration_bounds = array<i64: 2>, scalar_prefetch = 2 : i64, scratch_operands = 3 : i64, tpu.core_type = #tpu.core_type<tc>, window_params = [{}, {}, {transform_indices = @transform_2, window_bounds = array<i64: 1, 128>}]} {
    %c128_i32 = arith.constant 128 : i32
    %0 = arith.muli %arg0, %c128_i32 : i32
    %c0_i32 = arith.constant 0 : i32
    %c128_i32_0 = arith.constant 128 : i32
    %1 = arith.addi %c0_i32, %c128_i32_0 : i32
    %c1_i32 = arith.constant 1 : i32
    scf.for %arg9 = %c0_i32 to %1 step %c1_i32  : i32 {
      %9 = arith.addi %0, %arg9 : i32
      %10 = arith.index_cast %9 : i32 to index
      %11 = memref.load %arg1[%10] : memref<256xi32, #tpu.memory_space<smem>>
      %12 = arith.addi %0, %arg9 : i32
      %13 = arith.index_cast %12 : i32 to index
      %14 = memref.load %arg2[%13] : memref<256xi32, #tpu.memory_space<smem>>
      %c0_i32_11 = arith.constant 0 : i32
      %c0_i32_12 = arith.constant 0 : i32
      %15 = tpu.memref_slice %arg3[%11, %c0_i32_12] : memref<64x32xf32, #tpu.memory_space<any>> -> memref<1x32xf32, #tpu.memory_space<any>>
      %c0_i32_13 = arith.constant 0 : i32
      %16 = tpu.memref_slice %arg6[%arg9, %c0_i32_13] : memref<128x32xf32, #tpu.memory_space<vmem>> -> memref<1x32xf32, #tpu.memory_space<vmem>>
      %17 = tpu.memref_slice %arg8[%c0_i32_11] : memref<2x!tpu.dma_semaphore, #tpu.memory_space<semaphore_mem>> -> memref<1x!tpu.dma_semaphore, #tpu.memory_space<semaphore_mem>>
      %18 = tpu.memref_squeeze %17 : memref<1x!tpu.dma_semaphore, #tpu.memory_space<semaphore_mem>> -> memref<!tpu.dma_semaphore, #tpu.memory_space<semaphore_mem>>
      tpu.enqueue_dma source(%15 : memref<1x32xf32, #tpu.memory_space<any>>) target(%16 : memref<1x32xf32, #tpu.memory_space<vmem>>) target_semaphore(%18 : memref<!tpu.dma_semaphore, #tpu.memory_space<semaphore_mem>>)
      %c1_i32_14 = arith.constant 1 : i32
      %c0_i32_15 = arith.constant 0 : i32
      %19 = tpu.memref_slice %arg4[%14, %c0_i32_15] : memref<96x32xf32, #tpu.memory_space<any>> -> memref<1x32xf32, #tpu.memory_space<any>>
      %c0_i32_16 = arith.constant 0 : i32
      %20 = tpu.memref_slice %arg7[%arg9, %c0_i32_16] : memref<128x32xf32, #tpu.memory_space<vmem>> -> memref<1x32xf32, #tpu.memory_space<vmem>>
      %21 = tpu.memref_slice %arg8[%c1_i32_14] : memref<2x!tpu.dma_semaphore, #tpu.memory_space<semaphore_mem>> -> memref<1x!tpu.dma_semaphore, #tpu.memory_space<semaphore_mem>>
      %22 = tpu.memref_squeeze %21 : memref<1x!tpu.dma_semaphore, #tpu.memory_space<semaphore_mem>> -> memref<!tpu.dma_semaphore, #tpu.memory_space<semaphore_mem>>
      tpu.enqueue_dma source(%19 : memref<1x32xf32, #tpu.memory_space<any>>) target(%20 : memref<1x32xf32, #tpu.memory_space<vmem>>) target_semaphore(%22 : memref<!tpu.dma_semaphore, #tpu.memory_space<semaphore_mem>>)
    }
    %c128_i32_1 = arith.constant 128 : i32
    %c0_i32_2 = arith.constant 0 : i32
    %c128_i32_3 = arith.constant 128 : i32
    %2 = arith.addi %c0_i32_2, %c128_i32_3 : i32
    %c1_i32_4 = arith.constant 1 : i32
    scf.for %arg9 = %c0_i32_2 to %2 step %c1_i32_4  : i32 {
      %c0_i32_11 = arith.constant 0 : i32
      %c0_i32_12 = arith.constant 0 : i32
      %c0_i32_13 = arith.constant 0 : i32
      %9 = tpu.memref_slice %arg3[%c0_i32_12, %c0_i32_13] : memref<64x32xf32, #tpu.memory_space<any>> -> memref<1x32xf32, #tpu.memory_space<any>>
      %c0_i32_14 = arith.constant 0 : i32
      %10 = tpu.memref_slice %arg6[%arg9, %c0_i32_14] : memref<128x32xf32, #tpu.memory_space<vmem>> -> memref<1x32xf32, #tpu.memory_space<vmem>>
      %11 = tpu.memref_slice %arg8[%c0_i32_11] : memref<2x!tpu.dma_semaphore, #tpu.memory_space<semaphore_mem>> -> memref<1x!tpu.dma_semaphore, #tpu.memory_space<semaphore_mem>>
      %12 = tpu.memref_squeeze %11 : memref<1x!tpu.dma_semaphore, #tpu.memory_space<semaphore_mem>> -> memref<!tpu.dma_semaphore, #tpu.memory_space<semaphore_mem>>
      tpu.wait_dma2 semaphore(%12 : memref<!tpu.dma_semaphore, #tpu.memory_space<semaphore_mem>>) src(%9 : memref<1x32xf32, #tpu.memory_space<any>>) dst(%10 : memref<1x32xf32, #tpu.memory_space<vmem>>)
      %c1_i32_15 = arith.constant 1 : i32
      %c0_i32_16 = arith.constant 0 : i32
      %c0_i32_17 = arith.constant 0 : i32
      %13 = tpu.memref_slice %arg4[%c0_i32_16, %c0_i32_17] : memref<96x32xf32, #tpu.memory_space<any>> -> memref<1x32xf32, #tpu.memory_space<any>>
      %c0_i32_18 = arith.constant 0 : i32
      %14 = tpu.memref_slice %arg7[%arg9, %c0_i32_18] : memref<128x32xf32, #tpu.memory_space<vmem>> -> memref<1x32xf32, #tpu.memory_space<vmem>>
      %15 = tpu.memref_slice %arg8[%c1_i32_15] : memref<2x!tpu.dma_semaphore, #tpu.memory_space<semaphore_mem>> -> memref<1x!tpu.dma_semaphore, #tpu.memory_space<semaphore_mem>>
      %16 = tpu.memref_squeeze %15 : memref<1x!tpu.dma_semaphore, #tpu.memory_space<semaphore_mem>> -> memref<!tpu.dma_semaphore, #tpu.memory_space<semaphore_mem>>
      tpu.wait_dma2 semaphore(%16 : memref<!tpu.dma_semaphore, #tpu.memory_space<semaphore_mem>>) src(%13 : memref<1x32xf32, #tpu.memory_space<any>>) dst(%14 : memref<1x32xf32, #tpu.memory_space<vmem>>)
    }
    %c128_i32_5 = arith.constant 128 : i32
    %c0 = arith.constant 0 : index
    %c0_6 = arith.constant 0 : index
    %3 = vector.load %arg6[%c0, %c0_6] : memref<128x32xf32, #tpu.memory_space<vmem>>, vector<128x32xf32>
    %c0_7 = arith.constant 0 : index
    %c0_8 = arith.constant 0 : index
    %4 = vector.load %arg7[%c0_7, %c0_8] : memref<128x32xf32, #tpu.memory_space<vmem>>, vector<128x32xf32>
    %5 = arith.mulf %3, %4 : vector<128x32xf32>
    %cst = arith.constant dense<0.000000e+00> : vector<128xf32>
    %6 = vector.multi_reduction <add>, %5, %cst [1] : vector<128x32xf32> to vector<128xf32>
    %7 = vector.shape_cast %6 : vector<128xf32> to vector<1x128xf32>
    %c0_9 = arith.constant 0 : index
    %c0_10 = arith.constant 0 : index
    %8 = vector.load %arg5[%c0_9, %c0_10] : memref<1x128xf32, #tpu.memory_space<vmem>>, vector<1x128xf32>
    tpu.vector_store %arg5[%c0_9, %c0_10], %7 {strides = array<i32>} : memref<1x128xf32, #tpu.memory_space<vmem>>, vector<1x128xf32>,
    return
  }
  func.func @transform_2(%arg0: i32, %arg1: memref<256xi32, #tpu.memory_space<smem>>, %arg2: memref<256xi32, #tpu.memory_space<smem>>) -> (i32, i32) {
    %c0_i32 = arith.constant 0 : i32
    %c0_i32_0 = arith.constant 0 : i32
    return %c0_i32, %arg0 : i32, i32
  }
}

</mosaic_0001>

<llo_original>
// kernel: adv_sampler_forward.3
$region0: #{adv_sampler_forward.3}
  #allocation0 [shape = 'u32[]', space=smem, size = 0x4, offset = 0x4, fixed_abs, tag = 'smem constant byte address 0x4 - core index']
  #allocation1 [shape = 'u32[144,128]{1,0:T(1,128)}', space=vmem, size = 0x12000, scoped, tag = 'internal scratch']
  %s0 = inlined_call_operand.vmem [shape: f32[1,256], index: 0, kind: input, shape index: {}]
  %s1 = inlined_call_operand.vmem [shape: f32[1,256], index: 1, kind: output, shape index: {}]
  %s2 = sld [smem:[#allocation0]]
  $region14: #{adv_sampler_forward.3} parent=0
    _
  %s4 = ssub.s32 1, %s2
  %s5 = scalar_select 0, %s4, %s2
  // Predicated region
  $region2: #{adv_sampler_forward.3} parent=0 // pred_check
    _
  $region3: #{adv_sampler_forward.3} parent=0 // pred_check_branch
    %7 = sbr.rel (0) target = $region5
  $region4: #{adv_sampler_forward.3} parent=0 // pred_region
    _
  $region5: #{adv_sampler_forward.3} parent=0 // pred_fallthru
    _
  %v8 = vld [vmem:[%s0] sm:$0x3]
  %v9 = vlaneseq
  %v10 = vand.u32 %v9, 127
  %v11 = vadd.s32 %v10, 128
  %vm12 = vcmp.lt.s32.totalorder %v10, 200
  %vm13 = vcmp.lt.s32.totalorder %v11, 200
  %v15 = vlaneseq
  %v16 = vshrl.u32 %v15, 7
  %v17 = vsub.s32 0, %v16
  %v18 = vrot.slane %v8, %v17
  %v19 = vlaneseq
  %v20 = vshrl.u32 %v19, 7
  %v21 = vsub.s32 1, %v20
  %v22 = vrot.slane %v8, %v21
  %v25 = vsel %vm12, %v18, -1e+30
  %v26 = vsel %vm13, %v22, -1e+30
  %vm27 = vcmask 1040384
  %v28 = vsel %vm27, %v25, -inf
  %v29 = vsel %vm27, %v26, -inf
  %v30 = vmax.f32 %v28, %v29
  %31 = vmax.xlane.f32.xlu0 %v30
  %v32 = vpop.xlane.xlu0 %31
  %v33 = vsub.f32 %v25, %v32
  %v34 = vsub.f32 %v26, %v32
  %v35 = vmul.f32 %v33, 1.442695
  %v36 = vpow.pop %v35
  %v37 = vmul.f32 %v34, 1.442695
  %v38 = vpow.pop %v37
  %v39 = vsel %vm27, %v36, 0.0
  %v40 = vsel %vm27, %v38, 0.0
  %v41 = vadd.f32 %v39, %v40
  %42 = vadd.xlane.f32.xlu0 %v41
  %v43 = vpop.xlane.xlu0 %42
  %v44 = vrcp.pop %v43
  %v45 = vmul.f32 %v36, %v44
  %v46 = vmul.f32 %v38, %v44
  %v49 = vcombine.low %v45, %v46
  %v51 = vunpack.c.l.s4 1966171168
  %v52 = vunpack.c.0.s8 %v51
  %v53 = vlaneseq
  %v54 = vshrl.u32 %v53, 7
  %v55 = vsub.s32 %v52, %v54
  %v56 = vrot.slane %v49, %v55
  %v58 = vunpack.c.l.s4 1966171168
  %v59 = vunpack.c.0.s8 %v58
  %v60 = vlaneseq
  %v61 = vshrl.u32 %v60, 7
  %v62 = vsub.s32 %v59, %v61
  %v63 = vrot.slane %v56, %v62
  %v65 = vlaneseq
  %vm66 = vcmp.ge.s32.totalorder %v65, 0
  %vm67 = vcmp.lt.s32.totalorder %v65, 256
  %vm68 = vmand %vm66, %vm67
  %69 = vst.msk [vmem:[%s1] sm:$0x3] %vm68, %v63
  // Predicated region
  $region6: #{adv_sampler_forward.3} parent=0 // pred_check
    _
  $region7: #{adv_sampler_forward.3} parent=0 // pred_check_branch
    %71 = sbr.rel (0) target = $region9
  $region8: #{adv_sampler_forward.3} parent=0 // pred_region
    _
  $region9: #{adv_sampler_forward.3} parent=0 // pred_fallthru
    _
  // Predicated region
  $region10: #{adv_sampler_forward.3} parent=0 // pred_check
    _
  $region11: #{adv_sampler_forward.3} parent=0 // pred_check_branch
    %73 = sbr.rel (0) target = $region13
  $region12: #{adv_sampler_forward.3} parent=0 // pred_region
    _
  $region13: #{adv_sampler_forward.3} parent=0 // pred_fallthru
    _

// kernel: adv_sampler_forward.2
$region0: #{adv_sampler_forward.2}
  #allocation0 [shape = 'u32[]', space=smem, size = 0x4, offset = 0x4, fixed_abs, tag = 'smem constant byte address 0x4 - core index']
  #allocation1 [shape = 'u32[144,128]{1,0:T(1,128)}', space=vmem, size = 0x12000, scoped, tag = 'internal scratch']
  #allocation2 [shape = 'f32[128,32]{1,0:T(8,128)}', space=vmem, size = 0x10000, scoped, tag = 'scratch operand']
  #allocation3 [shape = 'f32[128,32]{1,0:T(8,128)}', space=vmem, size = 0x10000, scoped, tag = 'scratch operand']
  #allocation4 [shape = 's32[2]{0}', space=sflag, size = 0x8, scoped, tag = 'scratch operand']
  #allocation5 [shape = 's32[1]{0}', space=sflag, size = 0x4, scoped, tag = 'scoped memory for adv_sampler_forward.2']
  #allocation6 [shape = 'u8[1024]{0}', space=smem, size = 0x400, scoped, tag = 'prefetched SMEM operand 0']
  #allocation7 [shape = 'u8[1024]{0}', space=smem, size = 0x400, scoped, tag = 'prefetched SMEM operand 1']
  #allocation8 [shape = 's32[]', space=sflag, size = 0x4, offset = 0, fixed_abs, tag = 'sflag constant byte address 0x0 - dummy sync flag']
  #allocation9 [shape = 's32[]', space=sflag, size = 0x4, offset = 0, fixed_abs, tag = 'sflag constant byte address 0x0 - dummy sync flag']
  %s0 = inlined_call_operand.vmem [shape: s32[256], index: 0, kind: input, shape index: {}]
  %s1 = inlined_call_operand.vmem [shape: s32[256], index: 1, kind: input, shape index: {}]
  %s2 = inlined_call_operand.vmem [shape: f32[64,32], index: 2, kind: input, shape index: {}]
  %s3 = inlined_call_operand.vmem [shape: f32[96,32], index: 3, kind: input, shape index: {}]
  %s4 = inlined_call_operand.vmem [shape: f32[1,256], index: 4, kind: output, shape index: {}]
  %s5 = sld [smem:[#allocation0]]
  $region99: #{adv_sampler_forward.2} parent=0
    _
  %s7 = ssub.s32 1, %s5
  %s8 = scalar_select 0, %s7, %s5
  %s9 = sshll.u32 %s0, 4
  %s10 = int_to_ptr.vmem [resolvable:$true] %s9
  %12 = dma.vmem_to_smem %s10, 32, [#allocation6], [#allocation5]
  %s13 = sshll.u32 %s1, 4
  %s14 = int_to_ptr.vmem [resolvable:$true] %s13
  %16 = dma.vmem_to_smem %s14, 32, [#allocation7], [#allocation5]
  %17 = dma.done [#allocation5], 64
  %18 = sfence
  loop: start=0, step=1, limit=3
  $region2: #{adv_sampler_forward.2} parent=0 // loop_pre_header
    _
  $region3: #{adv_sampler_forward.2} parent=0 // loop_header
    %s20 = sphi 0, %s24
    %p21 = scmp.ge.s32.totalorder %s20, 3
    %s29 = sphi 0, %s31
    %s32 = sphi 0, %s29
    %s42 = sphi 0, %s32
  $region4: #{adv_sampler_forward.2} parent=0 // loop_header_branch
    %23 = sbr.rel (%p21) target = $region8
  $region5: #{adv_sampler_forward.2} parent=0 // loop_body
    %s25 = ssub.s32 %s20, 1
    %s26 = sadd.s32 %s20, 1
    %s27 = ssub.s32 %s20, %s26
    %p28 = scmp.eq.s32.totalorder %s27, 0
    %s30 = sadd.s32 %s29, 1
    %s31 = scalar_select %p28, %s29, %s30
    %p33 = pneg %p28
    %p34 = scmp.eq.s32.totalorder %s20, 1
    %p35 = por %p33, %p34
    %p36 = scmp.ne.s32.totalorder %s29, %s32
    %p37 = scmp.eq.s32.totalorder %s20, 0
    %p38 = por %p36, %p37
    %p39 = scmp.ne.s32.totalorder %s29, %s32
    %p40 = scmp.eq.s32.totalorder %s25, 1
    %p41 = por %p39, %p40
    %p43 = scmp.ne.s32.totalorder %s32, %s42
    %p44 = scmp.eq.s32.totalorder %s25, 0
    %p45 = por %p43, %p44
    %p46 = scmp.lt.s32.totalorder %s20, 2
    // Predicated region
    $region9: #{adv_sampler_forward.2} parent=5 // pred_check
      %p47 = pneg %p46
    $region10: #{adv_sampler_forward.2} parent=5 // pred_check_branch
      %49 = sbr.rel (%p47) target = $region12
    $region11: #{adv_sampler_forward.2} parent=5 // pred_region
      %p50 = pneg %p38
      %p51 = pneg %p35
      %p52 = scmp.lt.s32.totalorder %s20, 1
      %s53 = scalar_select %p52, %s20, 1
      %s54 = scalar_lea.vmem %s4, %s53
      %p55 = scmp.lt.s32.totalorder %s20, 1
      %s56 = scalar_select %p55, %s20, 1
      %s57 = scalar_lea.vmem %s4, %s56
      %s58 = smul.u32 %s20, 128
      loop: start=0, step=1, limit=128
      $region13: #{adv_sampler_forward.2} parent=11 // loop_pre_header
        _
      $region14: #{adv_sampler_forward.2} parent=11 // loop_header
        %s60 = sphi 0, %s64
        %p61 = scmp.ge.s32.totalorder %s60, 128
      $region15: #{adv_sampler_forward.2} parent=11 // loop_header_branch
        %63 = sbr.rel (%p61) target = $region19
      $region16: #{adv_sampler_forward.2} parent=11 // loop_body
        %s65 = sadd.s32 %s58, %s60
        %s66 = sld [smem:[#allocation6 + %s65]]
        %s67 = sld [smem:[#allocation7 + %s65]]
        %s68 = scalar_lea.vmem %s2, %s66
        %s69 = scalar_lea.vmem [#allocation2], %s60
        %p71 = scmp.lt.u32.totalorder 1, 8
        %p72 = pneg %p71
        // Predicated region
        $region20: #{adv_sampler_forward.2} parent=16 // pred_check
          _
        $region21: #{adv_sampler_forward.2} parent=16 // pred_check_branch
          %74 = sbr.rel (%p71) target = $region23
        $region22: #{adv_sampler_forward.2} parent=16 // pred_region
          %s90 = sand.u32 1, 7
          %p91 = scmp.eq.s32.totalorder %s90, 0
          %p92 = pneg %p91
          // Predicated region
          $region35: #{adv_sampler_forward.2} parent=22 // pred_check
            _
          $region36: #{adv_sampler_forward.2} parent=22 // pred_check_branch
            %94 = sbr.rel (%p91) target = $region38
          $region37: #{adv_sampler_forward.2} parent=22 // pred_region
            %s95 = sand.u32 1, 7
            %s96 = ssub.s32 1, %s95
            %s97 = scalar_lea.vmem %s68, %s96
            %s98 = ssub.s32 1, %s95
            %s99 = scalar_lea.vmem %s69, %s98 [#allocation2]
            %s100 = sshll.u32 1, %s95
            %s101 = ssub.s32 %s100, 1
            loop: start=0, step=1, limit=1
            $region39: #{adv_sampler_forward.2} parent=37 // loop_pre_header
              _
            $region40: #{adv_sampler_forward.2} parent=37 // loop_header
              %s103 = sphi 0, %s107
              %p104 = scmp.ge.s32.totalorder %s103, 1
              %s108 = sphi %s97, %s97
              %s109 = sphi %s99, %s99
            $region41: #{adv_sampler_forward.2} parent=37 // loop_header_branch
              %106 = sbr.rel (%p104) target = $region45
            $region42: #{adv_sampler_forward.2} parent=37 // loop_body
              %v110 = vld [vmem:[%s108] sm:%s101]
              %111 = vst [vmem:[%s109] sm:%s101] %v110
            $region43: #{adv_sampler_forward.2} parent=37 // loop_footer
              %s107 = sadd.s32 1, %s103
            $region44: #{adv_sampler_forward.2} parent=37 // loop_footer_branch
              %102 = sbr.rel target = $region40
            $region45: #{adv_sampler_forward.2} parent=37 // loop_exit
              _
          $region38: #{adv_sampler_forward.2} parent=22 // pred_fallthru
            _
        $region23: #{adv_sampler_forward.2} parent=16 // pred_fallthru
          _
        // Predicated region
        $region24: #{adv_sampler_forward.2} parent=16 // pred_check
          %p75 = pneg %p71
        $region25: #{adv_sampler_forward.2} parent=16 // pred_check_branch
          %77 = sbr.rel (%p75) target = $region27
        $region26: #{adv_sampler_forward.2} parent=16 // pred_region
          %s78 = sshll.u32 1, 1
          %s79 = ssub.s32 %s78, 1
          loop: start=0, step=1, limit=1
          $region28: #{adv_sampler_forward.2} parent=26 // loop_pre_header
            _
          $region29: #{adv_sampler_forward.2} parent=26 // loop_header
            %s81 = sphi 0, %s85
            %p82 = scmp.ge.s32.totalorder %s81, 1
            %s86 = sphi %s68, %s68
            %s87 = sphi %s69, %s69
          $region30: #{adv_sampler_forward.2} parent=26 // loop_header_branch
            %84 = sbr.rel (%p82) target = $region34
          $region31: #{adv_sampler_forward.2} parent=26 // loop_body
            %v88 = vld [vmem:[%s86] sm:%s79]
            %89 = vst [vmem:[%s87] sm:%s79] %v88
          $region32: #{adv_sampler_forward.2} parent=26 // loop_footer
            %s85 = sadd.s32 1, %s81
          $region33: #{adv_sampler_forward.2} parent=26 // loop_footer_branch
            %80 = sbr.rel target = $region29
          $region34: #{adv_sampler_forward.2} parent=26 // loop_exit
            _
        $region27: #{adv_sampler_forward.2} parent=16 // pred_fallthru
          _
        // Predicated region
        $region46: #{adv_sampler_forward.2} parent=16 // pred_check
          _
        $region47: #{adv_sampler_forward.2} parent=16 // pred_check_branch
          %114 = sbr.rel (0) target = $region49
        $region48: #{adv_sampler_forward.2} parent=16 // pred_region
          %115 = vsyncadd [#allocation4], 16
        $region49: #{adv_sampler_forward.2} parent=16 // pred_fallthru
          _
        %s116 = scalar_lea.vmem %s3, %s67
        %s117 = scalar_lea.vmem [#allocation3], %s60
        %s118 = scalar_lea.sflag [#allocation4], 1
        %p120 = scmp.lt.u32.totalorder 1, 8
        %p121 = pneg %p120
        // Predicated region
        $region50: #{adv_sampler_forward.2} parent=16 // pred_check
          _
        $region51: #{adv_sampler_forward.2} parent=16 // pred_check_branch
          %123 = sbr.rel (%p120) target = $region53
        $region52: #{adv_sampler_forward.2} parent=16 // pred_region
          %s139 = sand.u32 1, 7
          %p140 = scmp.eq.s32.totalorder %s139, 0
          %p141 = pneg %p140
          // Predicated region
          $region65: #{adv_sampler_forward.2} parent=52 // pred_check
            _
          $region66: #{adv_sampler_forward.2} parent=52 // pred_check_branch
            %143 = sbr.rel (%p140) target = $region68
          $region67: #{adv_sampler_forward.2} parent=52 // pred_region
            %s144 = sand.u32 1, 7
            %s145 = ssub.s32 1, %s144
            %s146 = scalar_lea.vmem %s116, %s145
            %s147 = ssub.s32 1, %s144
            %s148 = scalar_lea.vmem %s117, %s147 [#allocation3]
            %s149 = sshll.u32 1, %s144
            %s150 = ssub.s32 %s149, 1
            loop: start=0, step=1, limit=1
            $region69: #{adv_sampler_forward.2} parent=67 // loop_pre_header
              _
            $region70: #{adv_sampler_forward.2} parent=67 // loop_header
              %s152 = sphi 0, %s156
              %p153 = scmp.ge.s32.totalorder %s152, 1
              %s157 = sphi %s146, %s146
              %s158 = sphi %s148, %s148
            $region71: #{adv_sampler_forward.2} parent=67 // loop_header_branch
              %155 = sbr.rel (%p153) target = $region75
            $region72: #{adv_sampler_forward.2} parent=67 // loop_body
              %v159 = vld [vmem:[%s157] sm:%s150]
              %160 = vst [vmem:[%s158] sm:%s150] %v159
            $region73: #{adv_sampler_forward.2} parent=67 // loop_footer
              %s156 = sadd.s32 1, %s152
            $region74: #{adv_sampler_forward.2} parent=67 // loop_footer_branch
              %151 = sbr.rel target = $region70
            $region75: #{adv_sampler_forward.2} parent=67 // loop_exit
              _
          $region68: #{adv_sampler_forward.2} parent=52 // pred_fallthru
            _
        $region53: #{adv_sampler_forward.2} parent=16 // pred_fallthru
          _
        // Predicated region
        $region54: #{adv_sampler_forward.2} parent=16 // pred_check
          %p124 = pneg %p120
        $region55: #{adv_sampler_forward.2} parent=16 // pred_check_branch
          %126 = sbr.rel (%p124) target = $region57
        $region56: #{adv_sampler_forward.2} parent=16 // pred_region
          %s127 = sshll.u32 1, 1
          %s128 = ssub.s32 %s127, 1
          loop: start=0, step=1, limit=1
          $region58: #{adv_sampler_forward.2} parent=56 // loop_pre_header
            _
          $region59: #{adv_sampler_forward.2} parent=56 // loop_header
            %s130 = sphi 0, %s134
            %p131 = scmp.ge.s32.totalorder %s130, 1
            %s135 = sphi %s116, %s116
            %s136 = sphi %s117, %s117
          $region60: #{adv_sampler_forward.2} parent=56 // loop_header_branch
            %133 = sbr.rel (%p131) target = $region64
          $region61: #{adv_sampler_forward.2} parent=56 // loop_body
            %v137 = vld [vmem:[%s135] sm:%s128]
            %138 = vst [vmem:[%s136] sm:%s128] %v137
          $region62: #{adv_sampler_forward.2} parent=56 // loop_footer
            %s134 = sadd.s32 1, %s130
          $region63: #{adv_sampler_forward.2} parent=56 // loop_footer_branch
            %129 = sbr.rel target = $region59
          $region64: #{adv_sampler_forward.2} parent=56 // loop_exit
            _
        $region57: #{adv_sampler_forward.2} parent=16 // pred_fallthru
          _
        // Predicated region
        $region76: #{adv_sampler_forward.2} parent=16 // pred_check
          _
        $region77: #{adv_sampler_forward.2} parent=16 // pred_check_branch
          %163 = sbr.rel (0) target = $region79
        $region78: #{adv_sampler_forward.2} parent=16 // pred_region
          %164 = vsyncadd %s118, 16
        $region79: #{adv_sampler_forward.2} parent=16 // pred_fallthru
          _
      $region17: #{adv_sampler_forward.2} parent=11 // loop_footer
        %s64 = sadd.s32 1, %s60
      $region18: #{adv_sampler_forward.2} parent=11 // loop_footer_branch
        %59 = sbr.rel target = $region14
      $region19: #{adv_sampler_forward.2} parent=11 // loop_exit
        _
      loop: start=0, step=1, limit=128
      $region80: #{adv_sampler_forward.2} parent=11 // loop_pre_header
        _
      $region81: #{adv_sampler_forward.2} parent=11 // loop_header
        %s166 = sphi 0, %s170
        %p167 = scmp.ge.s32.totalorder %s166, 128
      $region82: #{adv_sampler_forward.2} parent=11 // loop_header_branch
        %169 = sbr.rel (%p167) target = $region86
      $region83: #{adv_sampler_forward.2} parent=11 // loop_body
        %s171 = smul.u32 1, 1
        %s172 = sshll.u32 %s171, 4
        %173 = dma.done [#allocation4], %s172
        %s174 = scalar_lea.sflag [#allocation4], 1
        %s175 = sshll.u32 %s171, 4
        %176 = dma.done %s174, %s175
      $region84: #{adv_sampler_forward.2} parent=11 // loop_footer
        %s170 = sadd.s32 1, %s166
      $region85: #{adv_sampler_forward.2} parent=11 // loop_footer_branch
        %165 = sbr.rel target = $region81
      $region86: #{adv_sampler_forward.2} parent=11 // loop_exit
        _
      %v177 = vld [vmem:[#allocation2] sm:$0xff]
      %v178 = vld [vmem:[#allocation2 + $0x8] sm:$0xff]
      %v179 = vld [vmem:[#allocation2 + $0x10] sm:$0xff]
      %v180 = vld [vmem:[#allocation2 + $0x18] sm:$0xff]
      %v181 = vld [vmem:[#allocation2 + $0x20] sm:$0xff]
      %v182 = vld [vmem:[#allocation2 + $0x28] sm:$0xff]
      %v183 = vld [vmem:[#allocation2 + $0x30] sm:$0xff]
      %v184 = vld [vmem:[#allocation2 + $0x38] sm:$0xff]
      %v185 = vld [vmem:[#allocation2 + $0x40] sm:$0xff]
      %v186 = vld [vmem:[#allocation2 + $0x48] sm:$0xff]
      %v187 = vld [vmem:[#allocation2 + $0x50] sm:$0xff]
      %v188 = vld [vmem:[#allocation2 + $0x58] sm:$0xff]
      %v189 = vld [vmem:[#allocation2 + $0x60] sm:$0xff]
      %v190 = vld [vmem:[#allocation2 + $0x68] sm:$0xff]
      %v191 = vld [vmem:[#allocation2 + $0x70] sm:$0xff]
      %v192 = vld [vmem:[#allocation2 + $0x78] sm:$0xff]
      %v193 = vld [vmem:[#allocation3] sm:$0xff]
      %v194 = vld [vmem:[#allocation3 + $0x8] sm:$0xff]
      %v195 = vld [vmem:[#allocation3 + $0x10] sm:$0xff]
      %v196 = vld [vmem:[#allocation3 + $0x18] sm:$0xff]
      %v197 = vld [vmem:[#allocation3 + $0x20] sm:$0xff]
      %v198 = vld [vmem:[#allocation3 + $0x28] sm:$0xff]
      %v199 = vld [vmem:[#allocation3 + $0x30] sm:$0xff]
      %v200 = vld [vmem:[#allocation3 + $0x38] sm:$0xff]
      %v201 = vld [vmem:[#allocation3 + $0x40] sm:$0xff]
      %v202 = vld [vmem:[#allocation3 + $0x48] sm:$0xff]
      %v203 = vld [vmem:[#allocation3 + $0x50] sm:$0xff]
      %v204 = vld [vmem:[#allocation3 + $0x58] sm:$0xff]
      %v205 = vld [vmem:[#allocation3 + $0x60] sm:$0xff]
      %v206 = vld [vmem:[#allocation3 + $0x68] sm:$0xff]
      %v207 = vld [vmem:[#allocation3 + $0x70] sm:$0xff]
      %v208 = vld [vmem:[#allocation3 + $0x78] sm:$0xff]
      %v209 = vmul.f32 %v177, %v193
      %v210 = vmul.f32 %v178, %v194
      %v211 = vmul.f32 %v179, %v195
      %v212 = vmul.f32 %v180, %v196
      %v213 = vmul.f32 %v181, %v197
      %v214 = vmul.f32 %v182, %v198
      %v215 = vmul.f32 %v183, %v199
      %v216 = vmul.f32 %v184, %v200
      %v217 = vmul.f32 %v185, %v201
      %v218 = vmul.f32 %v186, %v202
      %v219 = vmul.f32 %v187, %v203
      %v220 = vmul.f32 %v188, %v204
      %v221 = vmul.f32 %v189, %v205
      %v222 = vmul.f32 %v190, %v206
      %v223 = vmul.f32 %v191, %v207
      %v224 = vmul.f32 %v192, %v208
      %vm225 = vcmask 261120
      %v226 = vsel %vm225, %v209, 0.0
      %227 = vadd.xlane.f32.xlu0 %v226
      %v228 = vpop.xlane.xlu0 %227
      %v229 = vsel %vm225, %v210, 0.0
      %230 = vadd.xlane.f32.xlu0 %v229
      %v231 = vpop.xlane.xlu0 %230
      %v232 = vsel %vm225, %v211, 0.0
      %233 = vadd.xlane.f32.xlu0 %v232
      %v234 = vpop.xlane.xlu0 %233
      %v235 = vsel %vm225, %v212, 0.0
      %236 = vadd.xlane.f32.xlu0 %v235
      %v237 = vpop.xlane.xlu0 %236
      %v238 = vsel %vm225, %v213, 0.0
      %239 = vadd.xlane.f32.xlu0 %v238
      %v240 = vpop.xlane.xlu0 %239
      %v241 = vsel %vm225, %v214, 0.0
      %242 = vadd.xlane.f32.xlu0 %v241
      %v243 = vpop.xlane.xlu0 %242
      %v244 = vsel %vm225, %v215, 0.0
      %245 = vadd.xlane.f32.xlu0 %v244
      %v246 = vpop.xlane.xlu0 %245
      %v247 = vsel %vm225, %v216, 0.0
      %248 = vadd.xlane.f32.xlu0 %v247
      %v249 = vpop.xlane.xlu0 %248
      %v250 = vsel %vm225, %v217, 0.0
      %251 = vadd.xlane.f32.xlu0 %v250
      %v252 = vpop.xlane.xlu0 %251
      %v253 = vsel %vm225, %v218, 0.0
      %254 = vadd.xlane.f32.xlu0 %v253
      %v255 = vpop.xlane.xlu0 %254
      %v256 = vsel %vm225, %v219, 0.0
      %257 = vadd.xlane.f32.xlu0 %v256
      %v258 = vpop.xlane.xlu0 %257
      %v259 = vsel %vm225, %v220, 0.0
      %260 = vadd.xlane.f32.xlu0 %v259
      %v261 = vpop.xlane.xlu0 %260
      %v262 = vsel %vm225, %v221, 0.0
      %263 = vadd.xlane.f32.xlu0 %v262
      %v264 = vpop.xlane.xlu0 %263
      %v265 = vsel %vm225, %v222, 0.0
      %266 = vadd.xlane.f32.xlu0 %v265
      %v267 = vpop.xlane.xlu0 %266
      %v268 = vsel %vm225, %v223, 0.0
      %269 = vadd.xlane.f32.xlu0 %v268
      %v270 = vpop.xlane.xlu0 %269
      %v271 = vsel %vm225, %v224, 0.0
      %272 = vadd.xlane.f32.xlu0 %v271
      %v273 = vpop.xlane.xlu0 %272
      %v290 = vlaneseq
      %v291 = vand.u32 %v290, 127
      %v292 = vlaneseq
      %v293 = vshrl.u32 %v292, 7
      %v294 = vsub.s32 %v291, %v293
      %v295 = vrot.slane %v228, %v294
      %v296 = vadd.s32 %v291, 4294967288
      %v297 = vlaneseq
      %v298 = vshrl.u32 %v297, 7
      %v299 = vsub.s32 %v296, %v298
      %v300 = vrot.slane %v231, %v299
      %vm301 = vcmask 130112
      %v302 = vsel %vm301, %v300, %v295
      %v303 = vadd.s32 %v291, 4294967280
      %v304 = vlaneseq
      %v305 = vshrl.u32 %v304, 7
      %v306 = vsub.s32 %v303, %v305
      %v307 = vrot.slane %v234, %v306
      %vm308 = vcmask 195712
      %v309 = vsel %vm308, %v307, %v302
      %v310 = vadd.s32 %v291, 4294967272
      %v311 = vlaneseq
      %v312 = vshrl.u32 %v311, 7
      %v313 = vsub.s32 %v310, %v312
      %v314 = vrot.slane %v237, %v313
      %vm315 = vcmask 261312
      %v316 = vsel %vm315, %v314, %v309
      %v317 = vadd.s32 %v291, 4294967264
      %v318 = vlaneseq
      %v319 = vshrl.u32 %v318, 7
      %v320 = vsub.s32 %v317, %v319
      %v321 = vrot.slane %v240, %v320
      %vm322 = vcmask 326912
      %v323 = vsel %vm322, %v321, %v316
      %v324 = vadd.s32 %v291, 4294967256
      %v325 = vlaneseq
      %v326 = vshrl.u32 %v325, 7
      %v327 = vsub.s32 %v324, %v326
      %v328 = vrot.slane %v243, %v327
      %vm329 = vcmask 392512
      %v330 = vsel %vm329, %v328, %v323
      %v331 = vadd.s32 %v291, 4294967248
      %v332 = vlaneseq
      %v333 = vshrl.u32 %v332, 7
      %v334 = vsub.s32 %v331, %v333
      %v335 = vrot.slane %v246, %v334
      %vm336 = vcmask 458112
      %v337 = vsel %vm336, %v335, %v330
      %v338 = vadd.s32 %v291, 4294967240
      %v339 = vlaneseq
      %v340 = vshrl.u32 %v339, 7
      %v341 = vsub.s32 %v338, %v340
      %v342 = vrot.slane %v249, %v341
      %vm343 = vcmask 523712
      %v344 = vsel %vm343, %v342, %v337
      %v345 = vadd.s32 %v291, 4294967232
      %v346 = vlaneseq
      %v347 = vshrl.u32 %v346, 7
      %v348 = vsub.s32 %v345, %v347
      %v349 = vrot.slane %v252, %v348
      %vm350 = vcmask 589312
      %v351 = vsel %vm350, %v349, %v344
      %v352 = vadd.s32 %v291, 4294967224
      %v353 = vlaneseq
      %v354 = vshrl.u32 %v353, 7
      %v355 = vsub.s32 %v352, %v354
      %v356 = vrot.slane %v255, %v355
      %vm357 = vcmask 654912
      %v358 = vsel %vm357, %v356, %v351
      %v359 = vadd.s32 %v291, 4294967216
      %v360 = vlaneseq
      %v361 = vshrl.u32 %v360, 7
      %v362 = vsub.s32 %v359, %v361
      %v363 = vrot.slane %v258, %v362
      %vm364 = vcmask 720512
      %v365 = vsel %vm364, %v363, %v358
      %v366 = vadd.s32 %v291, 4294967208
      %v367 = vlaneseq
      %v368 = vshrl.u32 %v367, 7
      %v369 = vsub.s32 %v366, %v368
      %v370 = vrot.slane %v261, %v369
      %vm371 = vcmask 786112
      %v372 = vsel %vm371, %v370, %v365
      %v373 = vadd.s32 %v291, 4294967200
      %v374 = vlaneseq
      %v375 = vshrl.u32 %v374, 7
      %v376 = vsub.s32 %v373, %v375
      %v377 = vrot.slane %v264, %v376
      %vm378 = vcmask 851712
      %v379 = vsel %vm378, %v377, %v372
      %v380 = vadd.s32 %v291, 4294967192
      %v381 = vlaneseq
      %v382 = vshrl.u32 %v381, 7
      %v383 = vsub.s32 %v380, %v382
      %v384 = vrot.slane %v267, %v383
      %vm385 = vcmask 917312
      %v386 = vsel %vm385, %v384, %v379
      %v387 = vadd.s32 %v291, 4294967184
      %v388 = vlaneseq
      %v389 = vshrl.u32 %v388, 7
      %v390 = vsub.s32 %v387, %v389
      %v391 = vrot.slane %v270, %v390
      %vm392 = vcmask 982912
      %v393 = vsel %vm392, %v391, %v386
      %v394 = vadd.s32 %v291, 4294967176
      %v395 = vlaneseq
      %v396 = vshrl.u32 %v395, 7
      %v397 = vsub.s32 %v394, %v396
      %v398 = vrot.slane %v273, %v397
      %vm399 = vcmask 1048512
      %v400 = vsel %vm399, %v398, %v393
      %402 = vst [vmem:[%s57] sm:$0x1] %v400
      %p403 = scmp.lt.s32.totalorder %s20, 1
      %s404 = scalar_select %p403, %s20, 1
      %s405 = scalar_lea.vmem %s4, %s404
      // Predicated region
      $region87: #{adv_sampler_forward.2} parent=11 // pred_check
        %p406 = pneg %p35
      $region88: #{adv_sampler_forward.2} parent=11 // pred_check_branch
        %408 = sbr.rel (%p406) target = $region90
      $region89: #{adv_sampler_forward.2} parent=11 // pred_region
        _
      $region90: #{adv_sampler_forward.2} parent=11 // pred_fallthru
        _
    $region12: #{adv_sampler_forward.2} parent=5 // pred_fallthru
      _
    %p409 = scmp.le.s32.totalorder 1, %s20
    // Predicated region
    $region91: #{adv_sampler_forward.2} parent=5 // pred_check
      %p410 = pneg %p409
    $region92: #{adv_sampler_forward.2} parent=5 // pred_check_branch
      %412 = sbr.rel (%p410) target = $region94
    $region93: #{adv_sampler_forward.2} parent=5 // pred_region
      %s413 = ssub.s32 %s20, 1
      // Predicated region
      $region95: #{adv_sampler_forward.2} parent=93 // pred_check
        %p414 = pneg %p41
      $region96: #{adv_sampler_forward.2} parent=93 // pred_check_branch
        %416 = sbr.rel (%p414) target = $region98
      $region97: #{adv_sampler_forward.2} parent=93 // pred_region
        %p417 = scmp.lt.s32.totalorder %s25, 1
        %s418 = scalar_select %p417, %s25, 1
        %s419 = scalar_lea.vmem %s4, %s418
      $region98: #{adv_sampler_forward.2} parent=93 // pred_fallthru
        _
    $region94: #{adv_sampler_forward.2} parent=5 // pred_fallthru
      _
  $region6: #{adv_sampler_forward.2} parent=0 // loop_footer
    %s24 = sadd.s32 1, %s20
  $region7: #{adv_sampler_forward.2} parent=0 // loop_footer_branch
    %19 = sbr.rel target = $region3
  $region8: #{adv_sampler_forward.2} parent=0 // loop_exit
    _
  %420 = vsyncmov [#allocation4]
  %s421 = vpop.sfrf %420
  %p422 = scmp.eq.s32.totalorder %s421, 0
  %p423 = pneg %p422
  %425 = shalt.err (%p423)
  %s426 = scalar_lea.sflag [#allocation4], 1
  %427 = vsyncmov %s426
  %s428 = vpop.sfrf %427
  %p429 = scmp.eq.s32.totalorder %s428, 0
  %p430 = pneg %p429
  %432 = shalt.err (%p430)

</llo_original>
